<compile_context>
chip_gen: v7x
topology: tpu7x:2x2x1
jax: 0.10.0
libtpu: 0.0.40
codegen_flags: <defaults>
</compile_context>

<pallas_src>
import functools

import jax
import jax.numpy as jnp
import numpy as np
from jax.experimental import pallas as pl
from jax.experimental.pallas import tpu as pltpu

ALPHA = 0.2                      # LeakyReLU negative slope
NEG_INF = -1000000000000.0       # -1e12, as in the PyTorch module
# Set to jnp.bfloat16 for 2-4x MXU throughput (most impactful on v5e); kept at
# f32 here so the f32 reference check below stays tight.
MXU_DTYPE = jnp.float32


# ---------------------------------------------------------------------------
# Batched feature projection:  (B*N, in_f) @ (in_f, n_heads*out_c)
# ---------------------------------------------------------------------------
def _proj_kernel(x_ref, w_ref, o_ref):
    o_ref[...] = jnp.dot(
        x_ref[...].astype(MXU_DTYPE), w_ref[...].astype(MXU_DTYPE),
        preferred_element_type=jnp.float32).astype(o_ref.dtype)


def pallas_matmul(x, w):
    """Single-block matmul; operands are tiny at these shapes and fit VMEM.
    # TODO(synk): tile rows (grid=(M//tm,)) if B*N grows beyond a few thousand.
    """
    m, k = x.shape
    n = w.shape[1]
    return pl.pallas_call(
        _proj_kernel,
        out_shape=jax.ShapeDtypeStruct((m, n), jnp.float32),
        cost_estimate=pl.CostEstimate(
            flops=2 * m * k * n, transcendentals=0,
            bytes_accessed=4 * (m * k + k * n + m * n)),
    )(x, w)


# ---------------------------------------------------------------------------
# Per-(batch, head) attention core
# ---------------------------------------------------------------------------
def _attn_kernel(h_ref, bias_ref, amat_ref, out_ref, *, apply_relu):
    # h_ref: (N, C)  bias_ref: (N, N)  amat_ref: (C, 2)  out_ref: (N, C)
    h = h_ref[...]                                          # f32

    # e[i, j] = leakyrelu(h_i . a_src + h_j . a_dst)  -- single fused matmul
    e12 = jnp.dot(h.astype(MXU_DTYPE), amat_ref[...].astype(MXU_DTYPE),
                  preferred_element_type=jnp.float32)       # (N, 2)
    e = e12[:, 0:1] + jnp.transpose(e12[:, 1:2])            # (N, N)
    e = jnp.where(e > 0, e, ALPHA * e)                      # LeakyReLU

    # Adjacency mask (+ self loops) and the distance bias cij are folded into
    # one batch-invariant additive bias (precomputed in the wrapper).
    logits = e + bias_ref[...]

    # Softmax over j.  Row-sum reciprocal: EUP approx seed + 1 Newton step
    # (keeps the divide off the VPU while staying at f32 accuracy).
    logits = logits - jnp.max(logits, axis=-1, keepdims=True)
    p = jnp.exp(logits)
    s = jnp.sum(p, axis=-1, keepdims=True)
    r = pl.reciprocal(s, approx=True)
    r = r * (2.0 - s * r)
    attn = p * r

    hp = jnp.dot(attn.astype(MXU_DTYPE), h.astype(MXU_DTYPE),
                 preferred_element_type=jnp.float32)        # (N, C)
    if apply_relu:
        hp = jnp.maximum(hp, 0.0)
    out_ref[...] = hp.astype(out_ref.dtype)


def gat_attention(h, bias, a_mat, *, apply_relu):
    """h: (nh, B, N, C), bias: (nh, N, N), a_mat: (nh, C, 2) -> (nh, B, N, C)."""
    nh, B, N, C = h.shape
    kernel = functools.partial(_attn_kernel, apply_relu=apply_relu)
    grid_spec = pltpu.PrefetchScalarGridSpec(
        num_scalar_prefetch=0,
        grid=(B, nh),
        in_specs=[
            pl.BlockSpec((None, None, N, C), lambda b, hd: (hd, b, 0, 0)),  # h
            pl.BlockSpec((None, N, N), lambda b, hd: (hd, 0, 0)),           # bias
            pl.BlockSpec((None, C, 2), lambda b, hd: (hd, 0, 0)),           # a_mat
        ],
        out_specs=pl.BlockSpec((None, None, N, C), lambda b, hd: (hd, b, 0, 0)),
    )
    flops = B * nh * (4 * N * C + 2 * N * N * C + 6 * N * N)
    return pl.pallas_call(
        kernel,
        out_shape=jax.ShapeDtypeStruct((nh, B, N, C), jnp.float32),
        grid_spec=grid_spec,
        compiler_params=pltpu.CompilerParams(
            dimension_semantics=("parallel", "parallel")),
        cost_estimate=pl.CostEstimate(
            flops=flops,
            transcendentals=B * nh * N * (N + 1),
            bytes_accessed=4 * B * nh * (2 * N * C + N * N + 2 * C)),
    )(h, bias, a_mat)


# ---------------------------------------------------------------------------
# One multi-head GraphAttentionLayer (heads stacked on the leading param axis)
# ---------------------------------------------------------------------------
def gat_layer(x, adj, distance, W, a, We, *, apply_relu):
    """x: (B,N,in_f), adj: (N,N), distance: (N,N,out_c),
    W: (nh,in_f,out_c), a: (nh,2*out_c,1), We: (nh,out_c,1)
    -> (B, N, nh*out_c)   (heads concatenated, optional fused ReLU).
    """
    B, N, in_f = x.shape
    nh, _, out_c = W.shape

    # ---- batch-invariant precompute (hoisted out of the Pallas grid) -------
    adj_sl = adj + jnp.eye(N, dtype=adj.dtype)
    mask = jnp.where(adj_sl > 0, 0.0, NEG_INF).astype(jnp.float32)        # (N,N)
    dist2d = distance.reshape(N * N, out_c).astype(jnp.float32)
    cij = jnp.einsum('pk,hkl->hp', dist2d, We.astype(jnp.float32))
    bias = mask[None] + cij.reshape(nh, N, N)                             # (nh,N,N)

    # ---- batched feature projection: one fat matmul for all heads/batches --
    W_all = jnp.transpose(W, (1, 0, 2)).reshape(in_f, nh * out_c)
    h2d = pallas_matmul(x.reshape(B * N, in_f).astype(jnp.float32), W_all)
    h = h2d.reshape(B, N, nh, out_c).transpose(2, 0, 1, 3)                # (nh,B,N,C)

    # ---- fused attention vector: a_mat = [a_src | a_dst], lane-major -------
    a_mat = jnp.concatenate([a[:, :out_c, :], a[:, out_c:, :]],
                            axis=-1).astype(jnp.float32)                  # (nh,C,2)

    hp = gat_attention(h, bias, a_mat, apply_relu=apply_relu)             # (nh,B,N,C)
    # concat heads along the feature axis -> lane-dense (B, N, nh*out_c)
    return hp.transpose(1, 2, 0, 3).reshape(B, N, nh * out_c)


def gat_forward(x, adj, distance, params):
    """Full GAT forward: heads -> concat -> ReLU -> conv2 -> ReLU -> unsqueeze."""
    B, N = x.shape[0], x.shape[1]
    x = x.reshape(B, N, -1)
    out1 = gat_layer(x, adj, distance, params['W1'], params['a1'],
                     params['We1'], apply_relu=True)          # (B,N,nh*hid_c)
    out2 = gat_layer(out1, adj, distance, params['W2'][None],
                     params['a2'][None], params['We2'][None],
                     apply_relu=True)                         # (B,N,out_c)
    return out2[:, :, None, :]                                # (B,N,1,out_c)


# ---------------------------------------------------------------------------
# Pure-JAX reference mirroring the PyTorch forward
# ---------------------------------------------------------------------------
def _gat_layer_reference(x, adj, distance, W, a, We, alpha=ALPHA):
    B, N, _ = x.shape
    out_c = W.shape[1]
    adj = adj + jnp.eye(N, dtype=adj.dtype)
    h = x @ W
    a1, a2 = a[:out_c, 0], a[out_c:, 0]
    e = (h @ a1)[:, :, None] + (h @ a2)[:, None, :]
    e = jnp.where(e > 0, e, alpha * e)
    attn = jnp.where(adj[None] > 0, e, NEG_INF)
    cij = jnp.einsum('ijk,k->ij', distance, We[:, 0])
    attn = jax.nn.softmax(attn + cij[None], axis=2)
    return attn @ h


def gat_reference(x, adj, distance, params):
    B, N = x.shape[0], x.shape[1]
    x = x.reshape(B, N, -1)
    heads = [_gat_layer_reference(x, adj, distance, params['W1'][h],
                                  params['a1'][h], params['We1'][h])
             for h in range(params['W1'].shape[0])]
    out1 = jax.nn.relu(jnp.concatenate(heads, axis=-1))
    out2 = jax.nn.relu(_gat_layer_reference(out1, adj, distance, params['W2'],
                                            params['a2'], params['We2']))
    return out2[:, :, None, :]


def xavier_uniform(key, shape, gain):
    fan_in, fan_out = shape[-2], shape[-1]
    bound = gain * np.sqrt(6.0 / (fan_in + fan_out))
    return jax.random.uniform(key, shape, jnp.float32, -bound, bound)


if __name__ == "__main__":
    # Keep wrapper/reference matmuls at full f32 so they match the kernel's
    # f32-accumulated MXU path.
    jax.config.update("jax_default_matmul_precision", "highest")

    # x is [B, N, T, C]; the module reshapes to (B, N, T*C) with T*C = 12*in_c.
    # The shared `distance` [N, N, H] forces hid_c == out_c (== H).
    B, N, T, in_c = 2, 16, 12, 4
    n_heads, hid_c = 2, 16
    out_c = hid_c

    key = jax.random.PRNGKey(0)
    ks = jax.random.split(key, 9)
    x = jax.random.normal(ks[0], (B, N, T, in_c), jnp.float32)
    adj = (jax.random.uniform(ks[1], (N, N)) > 0.5).astype(jnp.float32)
    distance = jax.random.normal(ks[2], (N, N, hid_c), jnp.float32)

    in_f1 = T * in_c
    in_f2 = hid_c * n_heads
    # W / a use xavier_uniform(gain=1.414) as in the module; We is torch.empty
    # (uninitialized) in the original, so it gets a deterministic xavier init.
    params = {
        'W1': xavier_uniform(ks[3], (n_heads, in_f1, hid_c), gain=1.414),
        'a1': xavier_uniform(ks[4], (n_heads, 2 * hid_c, 1), gain=1.414),
        'We1': xavier_uniform(ks[5], (n_heads, hid_c, 1), gain=1.414),
        'W2': xavier_uniform(ks[6], (in_f2, out_c), gain=1.414),
        'a2': xavier_uniform(ks[7], (2 * out_c, 1), gain=1.414),
        'We2': xavier_uniform(ks[8], (out_c, 1), gain=1.414),
    }

    out = jax.block_until_ready(gat_forward(x, adj, distance, params))
    ref = gat_reference(x, adj, distance, params)
    # Tolerance slightly looser than a single layer's 1e-4: two stacked
    # attention layers plus the EUP-seeded (Newton-refined) reciprocal.
    np.testing.assert_allclose(np.asarray(out), np.asarray(ref),
                               rtol=1e-3, atol=1e-3)
    print("KERNEL_OK")
</pallas_src>

<mosaic_0001>
module attributes {stable_mosaic.version = 11 : i64} {
  func.func @_proj_kernel(%arg0: memref<32x48xf32, #tpu.memory_space<vmem>>, %arg1: memref<48x32xf32, #tpu.memory_space<vmem>>, %arg2: memref<32x32xf32, #tpu.memory_space<vmem>>) attributes {dimension_semantics = [], scalar_prefetch = 0 : i64, scratch_operands = 0 : i64, tpu.core_type = #tpu.core_type<tc>} {
    %c0 = arith.constant 0 : index
    %c0_0 = arith.constant 0 : index
    %0 = vector.load %arg0[%c0, %c0_0] : memref<32x48xf32, #tpu.memory_space<vmem>>, vector<32x48xf32>
    %c0_1 = arith.constant 0 : index
    %c0_2 = arith.constant 0 : index
    %1 = vector.load %arg1[%c0_1, %c0_2] : memref<48x32xf32, #tpu.memory_space<vmem>>, vector<48x32xf32>
    %cst = arith.constant dense<0.000000e+00> : vector<32x32xf32>
    %2 = tpu.matmul %0, %1, %cst {dimension_numbers = #tpu.dot_dimension_numbers<[1], [0], [0], [1], [0, 0, 1, 1], [], []>, precision = #tpu.contract_precision<fp32>} : vector<32x48xf32>, vector<48x32xf32>, vector<32x32xf32> -> vector<32x32xf32>
    %c0_3 = arith.constant 0 : index
    %c0_4 = arith.constant 0 : index
    %3 = vector.load %arg2[%c0_3, %c0_4] : memref<32x32xf32, #tpu.memory_space<vmem>>, vector<32x32xf32>
    tpu.vector_store %arg2[%c0_3, %c0_4], %2 {strides = array<i32>} : memref<32x32xf32, #tpu.memory_space<vmem>>, vector<32x32xf32>,
    return
  }
}

</mosaic_0001>

<llo_original>
// kernel: tpu_custom_call.1
$region0: #{tpu_custom_call.1}
  #allocation0 [shape = 'u32[]', space=smem, size = 0x4, offset = 0x4, fixed_abs, tag = 'smem constant byte address 0x4 - core index']
  #allocation1 [shape = 'u32[144,128]{1,0:T(1,128)}', space=vmem, size = 0x12000, scoped, tag = 'internal scratch']
  %s0 = inlined_call_operand.vmem [shape: f32[32,48], index: 0, kind: input, shape index: {}]
  %s1 = inlined_call_operand.vmem [shape: f32[48,32], index: 1, kind: input, shape index: {}]
  %s2 = inlined_call_operand.hbm [shape: f32[32,32], index: 2, kind: output, shape index: {}]
  %s3 = sld [smem:[#allocation0]]
  $region18: #{tpu_custom_call.1} parent=0
    _
  %s5 = ssub.s32 1, %s3
  %s6 = scalar_select 0, %s5, %s3
  $region1: #{tpu_custom_call.1} parent=0
    #allocation2 [shape = 'u8[16384]{0}', space=vmem, size = 0x4000, scoped, tag = 'output window, operand 0, single buffered']
    #allocation3 [shape = 's32[1]{0}', space=sflag, size = 0x4, scoped, tag = 'scoped memory for tpu_custom_call.1']
    %7 = vsyncpa [#allocation3], 0
    // Predicated region
    $region2: #{tpu_custom_call.1} parent=1 // pred_check
      _
    $region3: #{tpu_custom_call.1} parent=1 // pred_check_branch
      %9 = sbr.rel (0) target = $region5
    $region4: #{tpu_custom_call.1} parent=1 // pred_region
      _
    $region5: #{tpu_custom_call.1} parent=1 // pred_fallthru
      _
    // Predicated region
    $region6: #{tpu_custom_call.1} parent=1 // pred_check
      _
    $region7: #{tpu_custom_call.1} parent=1 // pred_check_branch
      %11 = sbr.rel (0) target = $region9
    $region8: #{tpu_custom_call.1} parent=1 // pred_region
      _
    $region9: #{tpu_custom_call.1} parent=1 // pred_fallthru
      _
    %v12 = vld [vmem:[%s0] sm:$0xff]
    %v13 = vld [vmem:[%s0 + $0x8] sm:$0xff]
    %v14 = vld [vmem:[%s0 + $0x10] sm:$0xff]
    %v15 = vld [vmem:[%s0 + $0x18] sm:$0xff]
    %v16 = vld [vmem:[%s1] sm:$0xff]
    %v17 = vld [vmem:[%s1 + $0x8] sm:$0xff]
    %v18 = vld [vmem:[%s1 + $0x10] sm:$0xff]
    %v19 = vld [vmem:[%s1 + $0x18] sm:$0xff]
    %v20 = vld [vmem:[%s1 + $0x20] sm:$0xff]
    %v21 = vld [vmem:[%s1 + $0x28] sm:$0xff]
    %vm22 = vcmask 392192
    %v24 = vsel %vm22, %v12, 0
    %v27 = vsel %vm22, %v13, 0
    %v30 = vsel %vm22, %v14, 0
    %v33 = vsel %vm22, %v15, 0
    %35 = vmatprep.subr.mxu0 0.0
    %v36 = vand.u32 %v16, 4294901760
    %37 = vmatpush1.msra.mxu0 %v36
    %38 = vmatprep.subr.mxu0 0.0
    %v39 = vand.u32 %v17, 4294901760
    %40 = vmatpush1.msra.mxu0 %v39
    %41 = vmatprep.subr.mxu0 0.0
    %v42 = vand.u32 %v18, 4294901760
    %43 = vmatpush1.msra.mxu0 %v42
    %44 = vmatprep.subr.mxu0 0.0
    %v45 = vand.u32 %v19, 4294901760
    %46 = vmatpush1.msra.mxu0 %v45
    %47 = vmatprep.subr.mxu0 0.0
    %v48 = vand.u32 %v20, 4294901760
    %49 = vmatpush1.msra.mxu0 %v48
    %50 = vmatprep.subr.mxu0 0.0
    %v51 = vand.u32 %v21, 4294901760
    %52 = vmatpush1.msra.mxu0 %v51
    %53 = vmatprep.subr.mxu0 0.0
    %54 = vmatpush1.msra.mxu0 0.0
    %55 = vmatprep.subr.mxu0 0.0
    %56 = vmatpush1.msra.mxu0 0.0
    %57 = vmatprep.subr.mxu0 0.0
    %58 = vmatpush1.msra.mxu0 0.0
    %59 = vmatprep.subr.mxu0 0.0
    %60 = vmatpush1.msra.mxu0 0.0
    %61 = vmatprep.subr.mxu0 0.0
    %62 = vmatpush1.msra.mxu0 0.0
    %63 = vmatprep.subr.mxu0 0.0
    %64 = vmatpush1.msra.mxu0 0.0
    %65 = vmatprep.subr.mxu0 0.0
    %66 = vmatpush1.msra.mxu0 0.0
    %67 = vmatprep.subr.mxu0 0.0
    %68 = vmatpush1.msra.mxu0 0.0
    %69 = vmatprep.subr.mxu0 0.0
    %70 = vmatpush1.msra.mxu0 0.0
    %71 = vmatprep.subr.mxu0 0.0
    %72 = vmatpush1.msra.mxu0 0.0
    %73 = vmatprep.subr.mxu0 0.0
    %74 = vmatpush1.msra.mxu0 0.0
    %75 = vmatprep.subr.mxu0 0.0
    %76 = vmatpush1.msra.mxu0 0.0
    %77 = vmatprep.subr.mxu0 0.0
    %78 = vmatpush1.msra.mxu0 0.0
    %79 = vmatprep.subr.mxu0 0.0
    %80 = vmatpush1.msra.mxu0 0.0
    %81 = vmatprep.subr.mxu0 0.0
    %82 = vmatpush1.msra.mxu0 0.0
    %83 = vmatprep.subr.mxu0 0.0
    %84 = vmatpush1.msra.mxu0 0.0
    %85 = vmatprep.subr.mxu0 0.0
    %86 = vmatpush1.msra.mxu0 0.0
    %87 = vmatprep.subr.mxu0 0.0
    %88 = vmatpush1.msra.mxu0 0.0
    %89 = vmatprep.subr.mxu0 0.0
    %90 = vmatpush1.msra.mxu0 0.0
    %91 = vmatprep.subr.mxu0 0.0
    %92 = vmatpush1.msra.mxu0 0.0
    %93 = vmatprep.subr.mxu0 0.0
    %94 = vmatpush1.msra.mxu0 0.0
    %95 = vmatprep.subr.mxu0 0.0
    %96 = vmatpush1.msra.mxu0 0.0
    %97 = vmatprep.subr.mxu0 0.0
    %98 = vmatpush1.msra.mxu0 0.0
    %99 = vmatprep.subr.mxu0 0.0
    %100 = vmatpush1.msra.mxu0 0.0
    %101 = vmatprep.subr.mxu0 0.0
    %102 = vmatpush1.msra.mxu0 0.0
    %103 = vmatprep.subr.mxu0 0.0
    %104 = vmatpush1.msra.mxu0 0.0
    %105 = vmatprep.mubr.f32.mxu0 0.0
    %v106 = vand.u32 %v24, 4294901760
    %v107 = vsub.f32 %v24, %v106
    %v108 = vand.u32 %v107, 4294901760
    %v109 = vsub.f32 %v107, %v108
    %v110 = vand.u32 %v109, 4294901760
    %111 = vmatmul.mubr.f32.gmra.mrb[0].mxu0 %v110
    %v112 = vpop.f32.mrb[0].mxu0
    %v113 = vadd.f32 0.0, %v112
    %v114 = vpop.f32.mrb[0].mxu0
    %115 = vmatprep.mubr.f32.mxu0 0.0
    %v116 = vand.u32 %v27, 4294901760
    %v117 = vsub.f32 %v27, %v116
    %v118 = vand.u32 %v117, 4294901760
    %v119 = vsub.f32 %v117, %v118
    %v120 = vand.u32 %v119, 4294901760
    %121 = vmatmul.mubr.f32.gmra.mrb[0].mxu0 %v120
    %v122 = vpop.f32.mrb[0].mxu0
    %v123 = vadd.f32 0.0, %v122
    %v124 = vpop.f32.mrb[0].mxu0
    %125 = vmatprep.mubr.f32.mxu0 0.0
    %v126 = vand.u32 %v30, 4294901760
    %v127 = vsub.f32 %v30, %v126
    %v128 = vand.u32 %v127, 4294901760
    %v129 = vsub.f32 %v127, %v128
    %v130 = vand.u32 %v129, 4294901760
    %131 = vmatmul.mubr.f32.gmra.mrb[0].mxu0 %v130
    %v132 = vpop.f32.mrb[0].mxu0
    %v133 = vadd.f32 0.0, %v132
    %v134 = vpop.f32.mrb[0].mxu0
    %135 = vmatprep.mubr.f32.mxu0 0.0
    %v136 = vand.u32 %v33, 4294901760
    %v137 = vsub.f32 %v33, %v136
    %v138 = vand.u32 %v137, 4294901760
    %v139 = vsub.f32 %v137, %v138
    %v140 = vand.u32 %v139, 4294901760
    %141 = vmatmul.mubr.f32.gmra.mrb[0].mxu0 %v140
    %v142 = vpop.f32.mrb[0].mxu0
    %v143 = vadd.f32 0.0, %v142
    %v144 = vpop.f32.mrb[0].mxu0
    %145 = vdwg.mxu0
    %146 = vmatprep.subr.mxu0 0.0
    %v147 = vand.u32 %v16, 4294901760
    %v148 = vsub.f32 %v16, %v147
    %v149 = vand.u32 %v148, 4294901760
    %v150 = vsub.f32 %v148, %v149
    %v151 = vand.u32 %v150, 4294901760
    %152 = vmatpush1.msra.mxu0 %v151
    %153 = vmatprep.subr.mxu0 0.0
    %v154 = vand.u32 %v17, 4294901760
    %v155 = vsub.f32 %v17, %v154
    %v156 = vand.u32 %v155, 4294901760
    %v157 = vsub.f32 %v155, %v156
    %v158 = vand.u32 %v157, 4294901760
    %159 = vmatpush1.msra.mxu0 %v158
    %160 = vmatprep.subr.mxu0 0.0
    %v161 = vand.u32 %v18, 4294901760
    %v162 = vsub.f32 %v18, %v161
    %v163 = vand.u32 %v162, 4294901760
    %v164 = vsub.f32 %v162, %v163
    %v165 = vand.u32 %v164, 4294901760
    %166 = vmatpush1.msra.mxu0 %v165
    %167 = vmatprep.subr.mxu0 0.0
    %v168 = vand.u32 %v19, 4294901760
    %v169 = vsub.f32 %v19, %v168
    %v170 = vand.u32 %v169, 4294901760
    %v171 = vsub.f32 %v169, %v170
    %v172 = vand.u32 %v171, 4294901760
    %173 = vmatpush1.msra.mxu0 %v172
    %174 = vmatprep.subr.mxu0 0.0
    %v175 = vand.u32 %v20, 4294901760
    %v176 = vsub.f32 %v20, %v175
    %v177 = vand.u32 %v176, 4294901760
    %v178 = vsub.f32 %v176, %v177
    %v179 = vand.u32 %v178, 4294901760
    %180 = vmatpush1.msra.mxu0 %v179
    %181 = vmatprep.subr.mxu0 0.0
    %v182 = vand.u32 %v21, 4294901760
    %v183 = vsub.f32 %v21, %v182
    %v184 = vand.u32 %v183, 4294901760
    %v185 = vsub.f32 %v183, %v184
    %v186 = vand.u32 %v185, 4294901760
    %187 = vmatpush1.msra.mxu0 %v186
    %188 = vmatprep.subr.mxu0 0.0
    %189 = vmatpush1.msra.mxu0 0.0
    %190 = vmatprep.subr.mxu0 0.0
    %191 = vmatpush1.msra.mxu0 0.0
    %192 = vmatprep.subr.mxu0 0.0
    %193 = vmatpush1.msra.mxu0 0.0
    %194 = vmatprep.subr.mxu0 0.0
    %195 = vmatpush1.msra.mxu0 0.0
    %196 = vmatprep.subr.mxu0 0.0
    %197 = vmatpush1.msra.mxu0 0.0
    %198 = vmatprep.subr.mxu0 0.0
    %199 = vmatpush1.msra.mxu0 0.0
    %200 = vmatprep.subr.mxu0 0.0
    %201 = vmatpush1.msra.mxu0 0.0
    %202 = vmatprep.subr.mxu0 0.0
    %203 = vmatpush1.msra.mxu0 0.0
    %204 = vmatprep.subr.mxu0 0.0
    %205 = vmatpush1.msra.mxu0 0.0
    %206 = vmatprep.subr.mxu0 0.0
    %207 = vmatpush1.msra.mxu0 0.0
    %208 = vmatprep.subr.mxu0 0.0
    %209 = vmatpush1.msra.mxu0 0.0
    %210 = vmatprep.subr.mxu0 0.0
    %211 = vmatpush1.msra.mxu0 0.0
    %212 = vmatprep.subr.mxu0 0.0
    %213 = vmatpush1.msra.mxu0 0.0
    %214 = vmatprep.subr.mxu0 0.0
    %215 = vmatpush1.msra.mxu0 0.0
    %216 = vmatprep.subr.mxu0 0.0
    %217 = vmatpush1.msra.mxu0 0.0
    %218 = vmatprep.subr.mxu0 0.0
    %219 = vmatpush1.msra.mxu0 0.0
    %220 = vmatprep.subr.mxu0 0.0
    %221 = vmatpush1.msra.mxu0 0.0
    %222 = vmatprep.subr.mxu0 0.0
    %223 = vmatpush1.msra.mxu0 0.0
    %224 = vmatprep.subr.mxu0 0.0
    %225 = vmatpush1.msra.mxu0 0.0
    %226 = vmatprep.subr.mxu0 0.0
    %227 = vmatpush1.msra.mxu0 0.0
    %228 = vmatprep.subr.mxu0 0.0
    %229 = vmatpush1.msra.mxu0 0.0
    %230 = vmatprep.subr.mxu0 0.0
    %231 = vmatpush1.msra.mxu0 0.0
    %232 = vmatprep.subr.mxu0 0.0
    %233 = vmatpush1.msra.mxu0 0.0
    %234 = vmatprep.subr.mxu0 0.0
    %235 = vmatpush1.msra.mxu0 0.0
    %236 = vmatprep.subr.mxu0 0.0
    %237 = vmatpush1.msra.mxu0 0.0
    %238 = vmatprep.subr.mxu0 0.0
    %239 = vmatpush1.msra.mxu0 0.0
    %240 = vmatprep.mubr.f32.mxu0 0.0
    %v241 = vand.u32 %v24, 4294901760
    %242 = vmatmul.mubr.f32.gmra.mrb[0].mxu0 %v241
    %v243 = vpop.f32.mrb[0].mxu0
    %v244 = vadd.f32 %v113, %v243
    %v245 = vpop.f32.mrb[0].mxu0
    %246 = vmatprep.mubr.f32.mxu0 0.0
    %v247 = vand.u32 %v27, 4294901760
    %248 = vmatmul.mubr.f32.gmra.mrb[0].mxu0 %v247
    %v249 = vpop.f32.mrb[0].mxu0
    %v250 = vadd.f32 %v123, %v249
    %v251 = vpop.f32.mrb[0].mxu0
    %252 = vmatprep.mubr.f32.mxu0 0.0
    %v253 = vand.u32 %v30, 4294901760
    %254 = vmatmul.mubr.f32.gmra.mrb[0].mxu0 %v253
    %v255 = vpop.f32.mrb[0].mxu0
    %v256 = vadd.f32 %v133, %v255
    %v257 = vpop.f32.mrb[0].mxu0
    %258 = vmatprep.mubr.f32.mxu0 0.0
    %v259 = vand.u32 %v33, 4294901760
    %260 = vmatmul.mubr.f32.gmra.mrb[0].mxu0 %v259
    %v261 = vpop.f32.mrb[0].mxu0
    %v262 = vadd.f32 %v143, %v261
    %v263 = vpop.f32.mrb[0].mxu0
    %264 = vdwg.mxu0
    %265 = vmatprep.subr.mxu0 0.0
    %v266 = vand.u32 %v16, 4294901760
    %v267 = vsub.f32 %v16, %v266
    %268 = vmatpush1.msra.mxu0 %v267
    %269 = vmatprep.subr.mxu0 0.0
    %v270 = vand.u32 %v17, 4294901760
    %v271 = vsub.f32 %v17, %v270
    %272 = vmatpush1.msra.mxu0 %v271
    %273 = vmatprep.subr.mxu0 0.0
    %v274 = vand.u32 %v18, 4294901760
    %v275 = vsub.f32 %v18, %v274
    %276 = vmatpush1.msra.mxu0 %v275
    %277 = vmatprep.subr.mxu0 0.0
    %v278 = vand.u32 %v19, 4294901760
    %v279 = vsub.f32 %v19, %v278
    %280 = vmatpush1.msra.mxu0 %v279
    %281 = vmatprep.subr.mxu0 0.0
    %v282 = vand.u32 %v20, 4294901760
    %v283 = vsub.f32 %v20, %v282
    %284 = vmatpush1.msra.mxu0 %v283
    %285 = vmatprep.subr.mxu0 0.0
    %v286 = vand.u32 %v21, 4294901760
    %v287 = vsub.f32 %v21, %v286
    %288 = vmatpush1.msra.mxu0 %v287
    %289 = vmatprep.subr.mxu0 0.0
    %290 = vmatpush1.msra.mxu0 0.0
    %291 = vmatprep.subr.mxu0 0.0
    %292 = vmatpush1.msra.mxu0 0.0
    %293 = vmatprep.subr.mxu0 0.0
    %294 = vmatpush1.msra.mxu0 0.0
    %295 = vmatprep.subr.mxu0 0.0
    %296 = vmatpush1.msra.mxu0 0.0
    %297 = vmatprep.subr.mxu0 0.0
    %298 = vmatpush1.msra.mxu0 0.0
    %299 = vmatprep.subr.mxu0 0.0
    %300 = vmatpush1.msra.mxu0 0.0
    %301 = vmatprep.subr.mxu0 0.0
    %302 = vmatpush1.msra.mxu0 0.0
    %303 = vmatprep.subr.mxu0 0.0
    %304 = vmatpush1.msra.mxu0 0.0
    %305 = vmatprep.subr.mxu0 0.0
    %306 = vmatpush1.msra.mxu0 0.0
    %307 = vmatprep.subr.mxu0 0.0
    %308 = vmatpush1.msra.mxu0 0.0
    %309 = vmatprep.subr.mxu0 0.0
    %310 = vmatpush1.msra.mxu0 0.0
    %311 = vmatprep.subr.mxu0 0.0
    %312 = vmatpush1.msra.mxu0 0.0
    %313 = vmatprep.subr.mxu0 0.0
    %314 = vmatpush1.msra.mxu0 0.0
    %315 = vmatprep.subr.mxu0 0.0
    %316 = vmatpush1.msra.mxu0 0.0
    %317 = vmatprep.subr.mxu0 0.0
    %318 = vmatpush1.msra.mxu0 0.0
    %319 = vmatprep.subr.mxu0 0.0
    %320 = vmatpush1.msra.mxu0 0.0
    %321 = vmatprep.subr.mxu0 0.0
    %322 = vmatpush1.msra.mxu0 0.0
    %323 = vmatprep.subr.mxu0 0.0
    %324 = vmatpush1.msra.mxu0 0.0
    %325 = vmatprep.subr.mxu0 0.0
    %326 = vmatpush1.msra.mxu0 0.0
    %327 = vmatprep.subr.mxu0 0.0
    %328 = vmatpush1.msra.mxu0 0.0
    %329 = vmatprep.subr.mxu0 0.0
    %330 = vmatpush1.msra.mxu0 0.0
    %331 = vmatprep.subr.mxu0 0.0
    %332 = vmatpush1.msra.mxu0 0.0
    %333 = vmatprep.subr.mxu0 0.0
    %334 = vmatpush1.msra.mxu0 0.0
    %335 = vmatprep.subr.mxu0 0.0
    %336 = vmatpush1.msra.mxu0 0.0
    %337 = vmatprep.subr.mxu0 0.0
    %338 = vmatpush1.msra.mxu0 0.0
    %339 = vmatprep.subr.mxu0 0.0
    %340 = vmatpush1.msra.mxu0 0.0
    %341 = vmatprep.mubr.f32.mxu0 0.0
    %v342 = vand.u32 %v24, 4294901760
    %v343 = vsub.f32 %v24, %v342
    %344 = vmatmul.mubr.f32.gmra.mrb[0].mxu0 %v343
    %v345 = vpop.f32.mrb[0].mxu0
    %v346 = vadd.f32 %v244, %v345
    %v347 = vpop.f32.mrb[0].mxu0
    %348 = vmatprep.mubr.f32.mxu0 0.0
    %v349 = vand.u32 %v27, 4294901760
    %v350 = vsub.f32 %v27, %v349
    %351 = vmatmul.mubr.f32.gmra.mrb[0].mxu0 %v350
    %v352 = vpop.f32.mrb[0].mxu0
    %v353 = vadd.f32 %v250, %v352
    %v354 = vpop.f32.mrb[0].mxu0
    %355 = vmatprep.mubr.f32.mxu0 0.0
    %v356 = vand.u32 %v30, 4294901760
    %v357 = vsub.f32 %v30, %v356
    %358 = vmatmul.mubr.f32.gmra.mrb[0].mxu0 %v357
    %v359 = vpop.f32.mrb[0].mxu0
    %v360 = vadd.f32 %v256, %v359
    %v361 = vpop.f32.mrb[0].mxu0
    %362 = vmatprep.mubr.f32.mxu0 0.0
    %v363 = vand.u32 %v33, 4294901760
    %v364 = vsub.f32 %v33, %v363
    %365 = vmatmul.mubr.f32.gmra.mrb[0].mxu0 %v364
    %v366 = vpop.f32.mrb[0].mxu0
    %v367 = vadd.f32 %v262, %v366
    %v368 = vpop.f32.mrb[0].mxu0
    %369 = vdwg.mxu0
    %370 = vmatprep.subr.mxu0 0.0
    %v371 = vand.u32 %v16, 4294901760
    %372 = vmatpush1.msra.mxu0 %v371
    %373 = vmatprep.subr.mxu0 0.0
    %v374 = vand.u32 %v17, 4294901760
    %375 = vmatpush1.msra.mxu0 %v374
    %376 = vmatprep.subr.mxu0 0.0
    %v377 = vand.u32 %v18, 4294901760
    %378 = vmatpush1.msra.mxu0 %v377
    %379 = vmatprep.subr.mxu0 0.0
    %v380 = vand.u32 %v19, 4294901760
    %381 = vmatpush1.msra.mxu0 %v380
    %382 = vmatprep.subr.mxu0 0.0
    %v383 = vand.u32 %v20, 4294901760
    %384 = vmatpush1.msra.mxu0 %v383
    %385 = vmatprep.subr.mxu0 0.0
    %v386 = vand.u32 %v21, 4294901760
    %387 = vmatpush1.msra.mxu0 %v386
    %388 = vmatprep.subr.mxu0 0.0
    %389 = vmatpush1.msra.mxu0 0.0
    %390 = vmatprep.subr.mxu0 0.0
    %391 = vmatpush1.msra.mxu0 0.0
    %392 = vmatprep.subr.mxu0 0.0
    %393 = vmatpush1.msra.mxu0 0.0
    %394 = vmatprep.subr.mxu0 0.0
    %395 = vmatpush1.msra.mxu0 0.0
    %396 = vmatprep.subr.mxu0 0.0
    %397 = vmatpush1.msra.mxu0 0.0
    %398 = vmatprep.subr.mxu0 0.0
    %399 = vmatpush1.msra.mxu0 0.0
    %400 = vmatprep.subr.mxu0 0.0
    %401 = vmatpush1.msra.mxu0 0.0
    %402 = vmatprep.subr.mxu0 0.0
    %403 = vmatpush1.msra.mxu0 0.0
    %404 = vmatprep.subr.mxu0 0.0
    %405 = vmatpush1.msra.mxu0 0.0
    %406 = vmatprep.subr.mxu0 0.0
    %407 = vmatpush1.msra.mxu0 0.0
    %408 = vmatprep.subr.mxu0 0.0
    %409 = vmatpush1.msra.mxu0 0.0
    %410 = vmatprep.subr.mxu0 0.0
    %411 = vmatpush1.msra.mxu0 0.0
    %412 = vmatprep.subr.mxu0 0.0
    %413 = vmatpush1.msra.mxu0 0.0
    %414 = vmatprep.subr.mxu0 0.0
    %415 = vmatpush1.msra.mxu0 0.0
    %416 = vmatprep.subr.mxu0 0.0
    %417 = vmatpush1.msra.mxu0 0.0
    %418 = vmatprep.subr.mxu0 0.0
    %419 = vmatpush1.msra.mxu0 0.0
    %420 = vmatprep.subr.mxu0 0.0
    %421 = vmatpush1.msra.mxu0 0.0
    %422 = vmatprep.subr.mxu0 0.0
    %423 = vmatpush1.msra.mxu0 0.0
    %424 = vmatprep.subr.mxu0 0.0
    %425 = vmatpush1.msra.mxu0 0.0
    %426 = vmatprep.subr.mxu0 0.0
    %427 = vmatpush1.msra.mxu0 0.0
    %428 = vmatprep.subr.mxu0 0.0
    %429 = vmatpush1.msra.mxu0 0.0
    %430 = vmatprep.subr.mxu0 0.0
    %431 = vmatpush1.msra.mxu0 0.0
    %432 = vmatprep.subr.mxu0 0.0
    %433 = vmatpush1.msra.mxu0 0.0
    %434 = vmatprep.subr.mxu0 0.0
    %435 = vmatpush1.msra.mxu0 0.0
    %436 = vmatprep.subr.mxu0 0.0
    %437 = vmatpush1.msra.mxu0 0.0
    %438 = vmatprep.subr.mxu0 0.0
    %439 = vmatpush1.msra.mxu0 0.0
    %440 = vmatprep.mubr.f32.mxu0 0.0
    %v441 = vand.u32 %v24, 4294901760
    %v442 = vsub.f32 %v24, %v441
    %v443 = vand.u32 %v442, 4294901760
    %444 = vmatmul.mubr.f32.gmra.mrb[0].mxu0 %v443
    %v445 = vpop.f32.mrb[0].mxu0
    %v446 = vadd.f32 %v346, %v445
    %v447 = vpop.f32.mrb[0].mxu0
    %448 = vmatprep.mubr.f32.mxu0 0.0
    %v449 = vand.u32 %v27, 4294901760
    %v450 = vsub.f32 %v27, %v449
    %v451 = vand.u32 %v450, 4294901760
    %452 = vmatmul.mubr.f32.gmra.mrb[0].mxu0 %v451
    %v453 = vpop.f32.mrb[0].mxu0
    %v454 = vadd.f32 %v353, %v453
    %v455 = vpop.f32.mrb[0].mxu0
    %456 = vmatprep.mubr.f32.mxu0 0.0
    %v457 = vand.u32 %v30, 4294901760
    %v458 = vsub.f32 %v30, %v457
    %v459 = vand.u32 %v458, 4294901760
    %460 = vmatmul.mubr.f32.gmra.mrb[0].mxu0 %v459
    %v461 = vpop.f32.mrb[0].mxu0
    %v462 = vadd.f32 %v360, %v461
    %v463 = vpop.f32.mrb[0].mxu0
    %464 = vmatprep.mubr.f32.mxu0 0.0
    %v465 = vand.u32 %v33, 4294901760
    %v466 = vsub.f32 %v33, %v465
    %v467 = vand.u32 %v466, 4294901760
    %468 = vmatmul.mubr.f32.gmra.mrb[0].mxu0 %v467
    %v469 = vpop.f32.mrb[0].mxu0
    %v470 = vadd.f32 %v367, %v469
    %v471 = vpop.f32.mrb[0].mxu0
    %472 = vdwg.mxu0
    %473 = vmatprep.subr.mxu0 0.0
    %v474 = vand.u32 %v16, 4294901760
    %v475 = vsub.f32 %v16, %v474
    %v476 = vand.u32 %v475, 4294901760
    %477 = vmatpush1.msra.mxu0 %v476
    %478 = vmatprep.subr.mxu0 0.0
    %v479 = vand.u32 %v17, 4294901760
    %v480 = vsub.f32 %v17, %v479
    %v481 = vand.u32 %v480, 4294901760
    %482 = vmatpush1.msra.mxu0 %v481
    %483 = vmatprep.subr.mxu0 0.0
    %v484 = vand.u32 %v18, 4294901760
    %v485 = vsub.f32 %v18, %v484
    %v486 = vand.u32 %v485, 4294901760
    %487 = vmatpush1.msra.mxu0 %v486
    %488 = vmatprep.subr.mxu0 0.0
    %v489 = vand.u32 %v19, 4294901760
    %v490 = vsub.f32 %v19, %v489
    %v491 = vand.u32 %v490, 4294901760
    %492 = vmatpush1.msra.mxu0 %v491
    %493 = vmatprep.subr.mxu0 0.0
    %v494 = vand.u32 %v20, 4294901760
    %v495 = vsub.f32 %v20, %v494
    %v496 = vand.u32 %v495, 4294901760
    %497 = vmatpush1.msra.mxu0 %v496
    %498 = vmatprep.subr.mxu0 0.0
    %v499 = vand.u32 %v21, 4294901760
    %v500 = vsub.f32 %v21, %v499
    %v501 = vand.u32 %v500, 4294901760
    %502 = vmatpush1.msra.mxu0 %v501
    %503 = vmatprep.subr.mxu0 0.0
    %504 = vmatpush1.msra.mxu0 0.0
    %505 = vmatprep.subr.mxu0 0.0
    %506 = vmatpush1.msra.mxu0 0.0
    %507 = vmatprep.subr.mxu0 0.0
    %508 = vmatpush1.msra.mxu0 0.0
    %509 = vmatprep.subr.mxu0 0.0
    %510 = vmatpush1.msra.mxu0 0.0
    %511 = vmatprep.subr.mxu0 0.0
    %512 = vmatpush1.msra.mxu0 0.0
    %513 = vmatprep.subr.mxu0 0.0
    %514 = vmatpush1.msra.mxu0 0.0
    %515 = vmatprep.subr.mxu0 0.0
    %516 = vmatpush1.msra.mxu0 0.0
    %517 = vmatprep.subr.mxu0 0.0
    %518 = vmatpush1.msra.mxu0 0.0
    %519 = vmatprep.subr.mxu0 0.0
    %520 = vmatpush1.msra.mxu0 0.0
    %521 = vmatprep.subr.mxu0 0.0
    %522 = vmatpush1.msra.mxu0 0.0
    %523 = vmatprep.subr.mxu0 0.0
    %524 = vmatpush1.msra.mxu0 0.0
    %525 = vmatprep.subr.mxu0 0.0
    %526 = vmatpush1.msra.mxu0 0.0
    %527 = vmatprep.subr.mxu0 0.0
    %528 = vmatpush1.msra.mxu0 0.0
    %529 = vmatprep.subr.mxu0 0.0
    %530 = vmatpush1.msra.mxu0 0.0
    %531 = vmatprep.subr.mxu0 0.0
    %532 = vmatpush1.msra.mxu0 0.0
    %533 = vmatprep.subr.mxu0 0.0
    %534 = vmatpush1.msra.mxu0 0.0
    %535 = vmatprep.subr.mxu0 0.0
    %536 = vmatpush1.msra.mxu0 0.0
    %537 = vmatprep.subr.mxu0 0.0
    %538 = vmatpush1.msra.mxu0 0.0
    %539 = vmatprep.subr.mxu0 0.0
    %540 = vmatpush1.msra.mxu0 0.0
    %541 = vmatprep.subr.mxu0 0.0
    %542 = vmatpush1.msra.mxu0 0.0
    %543 = vmatprep.subr.mxu0 0.0
    %544 = vmatpush1.msra.mxu0 0.0
    %545 = vmatprep.subr.mxu0 0.0
    %546 = vmatpush1.msra.mxu0 0.0
    %547 = vmatprep.subr.mxu0 0.0
    %548 = vmatpush1.msra.mxu0 0.0
    %549 = vmatprep.subr.mxu0 0.0
    %550 = vmatpush1.msra.mxu0 0.0
    %551 = vmatprep.subr.mxu0 0.0
    %552 = vmatpush1.msra.mxu0 0.0
    %553 = vmatprep.subr.mxu0 0.0
    %554 = vmatpush1.msra.mxu0 0.0
    %555 = vmatprep.mubr.f32.mxu0 0.0
    %v556 = vand.u32 %v24, 4294901760
    %557 = vmatmul.mubr.f32.gmra.mrb[0].mxu0 %v556
    %v558 = vpop.f32.mrb[0].mxu0
    %v559 = vadd.f32 %v446, %v558
    %v560 = vpop.f32.mrb[0].mxu0
    %561 = vmatprep.mubr.f32.mxu0 0.0
    %v562 = vand.u32 %v27, 4294901760
    %563 = vmatmul.mubr.f32.gmra.mrb[0].mxu0 %v562
    %v564 = vpop.f32.mrb[0].mxu0
    %v565 = vadd.f32 %v454, %v564
    %v566 = vpop.f32.mrb[0].mxu0
    %567 = vmatprep.mubr.f32.mxu0 0.0
    %v568 = vand.u32 %v30, 4294901760
    %569 = vmatmul.mubr.f32.gmra.mrb[0].mxu0 %v568
    %v570 = vpop.f32.mrb[0].mxu0
    %v571 = vadd.f32 %v462, %v570
    %v572 = vpop.f32.mrb[0].mxu0
    %573 = vmatprep.mubr.f32.mxu0 0.0
    %v574 = vand.u32 %v33, 4294901760
    %575 = vmatmul.mubr.f32.gmra.mrb[0].mxu0 %v574
    %v576 = vpop.f32.mrb[0].mxu0
    %v577 = vadd.f32 %v470, %v576
    %v578 = vpop.f32.mrb[0].mxu0
    %579 = vdwg.mxu0
    %580 = vmatprep.subr.mxu0 0.0
    %v581 = vand.u32 %v16, 4294901760
    %582 = vmatpush1.msra.mxu0 %v581
    %583 = vmatprep.subr.mxu0 0.0
    %v584 = vand.u32 %v17, 4294901760
    %585 = vmatpush1.msra.mxu0 %v584
    %586 = vmatprep.subr.mxu0 0.0
    %v587 = vand.u32 %v18, 4294901760
    %588 = vmatpush1.msra.mxu0 %v587
    %589 = vmatprep.subr.mxu0 0.0
    %v590 = vand.u32 %v19, 4294901760
    %591 = vmatpush1.msra.mxu0 %v590
    %592 = vmatprep.subr.mxu0 0.0
    %v593 = vand.u32 %v20, 4294901760
    %594 = vmatpush1.msra.mxu0 %v593
    %595 = vmatprep.subr.mxu0 0.0
    %v596 = vand.u32 %v21, 4294901760
    %597 = vmatpush1.msra.mxu0 %v596
    %598 = vmatprep.subr.mxu0 0.0
    %599 = vmatpush1.msra.mxu0 0.0
    %600 = vmatprep.subr.mxu0 0.0
    %601 = vmatpush1.msra.mxu0 0.0
    %602 = vmatprep.subr.mxu0 0.0
    %603 = vmatpush1.msra.mxu0 0.0
    %604 = vmatprep.subr.mxu0 0.0
    %605 = vmatpush1.msra.mxu0 0.0
    %606 = vmatprep.subr.mxu0 0.0
    %607 = vmatpush1.msra.mxu0 0.0
    %608 = vmatprep.subr.mxu0 0.0
    %609 = vmatpush1.msra.mxu0 0.0
    %610 = vmatprep.subr.mxu0 0.0
    %611 = vmatpush1.msra.mxu0 0.0
    %612 = vmatprep.subr.mxu0 0.0
    %613 = vmatpush1.msra.mxu0 0.0
    %614 = vmatprep.subr.mxu0 0.0
    %615 = vmatpush1.msra.mxu0 0.0
    %616 = vmatprep.subr.mxu0 0.0
    %617 = vmatpush1.msra.mxu0 0.0
    %618 = vmatprep.subr.mxu0 0.0
    %619 = vmatpush1.msra.mxu0 0.0
    %620 = vmatprep.subr.mxu0 0.0
    %621 = vmatpush1.msra.mxu0 0.0
    %622 = vmatprep.subr.mxu0 0.0
    %623 = vmatpush1.msra.mxu0 0.0
    %624 = vmatprep.subr.mxu0 0.0
    %625 = vmatpush1.msra.mxu0 0.0
    %626 = vmatprep.subr.mxu0 0.0
    %627 = vmatpush1.msra.mxu0 0.0
    %628 = vmatprep.subr.mxu0 0.0
    %629 = vmatpush1.msra.mxu0 0.0
    %630 = vmatprep.subr.mxu0 0.0
    %631 = vmatpush1.msra.mxu0 0.0
    %632 = vmatprep.subr.mxu0 0.0
    %633 = vmatpush1.msra.mxu0 0.0
    %634 = vmatprep.subr.mxu0 0.0
    %635 = vmatpush1.msra.mxu0 0.0
    %636 = vmatprep.subr.mxu0 0.0
    %637 = vmatpush1.msra.mxu0 0.0
    %638 = vmatprep.subr.mxu0 0.0
    %639 = vmatpush1.msra.mxu0 0.0
    %640 = vmatprep.subr.mxu0 0.0
    %641 = vmatpush1.msra.mxu0 0.0
    %642 = vmatprep.subr.mxu0 0.0
    %643 = vmatpush1.msra.mxu0 0.0
    %644 = vmatprep.subr.mxu0 0.0
    %645 = vmatpush1.msra.mxu0 0.0
    %646 = vmatprep.subr.mxu0 0.0
    %647 = vmatpush1.msra.mxu0 0.0
    %648 = vmatprep.subr.mxu0 0.0
    %649 = vmatpush1.msra.mxu0 0.0
    %650 = vmatprep.mubr.f32.mxu0 0.0
    %v651 = vand.u32 %v24, 4294901760
    %652 = vmatmul.mubr.f32.gmra.mrb[0].mxu0 %v651
    %v653 = vpop.f32.mrb[0].mxu0
    %v654 = vadd.f32 %v559, %v653
    %v655 = vpop.f32.mrb[0].mxu0
    %656 = vmatprep.mubr.f32.mxu0 0.0
    %v657 = vand.u32 %v27, 4294901760
    %658 = vmatmul.mubr.f32.gmra.mrb[0].mxu0 %v657
    %v659 = vpop.f32.mrb[0].mxu0
    %v660 = vadd.f32 %v565, %v659
    %v661 = vpop.f32.mrb[0].mxu0
    %662 = vmatprep.mubr.f32.mxu0 0.0
    %v663 = vand.u32 %v30, 4294901760
    %664 = vmatmul.mubr.f32.gmra.mrb[0].mxu0 %v663
    %v665 = vpop.f32.mrb[0].mxu0
    %v666 = vadd.f32 %v571, %v665
    %v667 = vpop.f32.mrb[0].mxu0
    %668 = vmatprep.mubr.f32.mxu0 0.0
    %v669 = vand.u32 %v33, 4294901760
    %670 = vmatmul.mubr.f32.gmra.mrb[0].mxu0 %v669
    %v671 = vpop.f32.mrb[0].mxu0
    %v672 = vadd.f32 %v577, %v671
    %v673 = vpop.f32.mrb[0].mxu0
    %674 = vdwg.mxu0
    %vm675 = vcmask 261120
    %676 = vst.msk [vmem:[#allocation2] sm:$0xff] %vm675, %v654
    %677 = vst.msk [vmem:[#allocation2 + $0x8] sm:$0xff] %vm675, %v660
    %678 = vst.msk [vmem:[#allocation2 + $0x10] sm:$0xff] %vm675, %v666
    %679 = vst.msk [vmem:[#allocation2 + $0x18] sm:$0xff] %vm675, %v672
    // Predicated region
    $region10: #{tpu_custom_call.1} parent=1 // pred_check
      _
    $region11: #{tpu_custom_call.1} parent=1 // pred_check_branch
      %681 = sbr.rel (0) target = $region13
    $region12: #{tpu_custom_call.1} parent=1 // pred_region
      %s683 = ssub.s32 512, 512
      %684 = vsyncadd [#allocation3], %s683
      %s685 = sshll.u32 [#allocation2], 4
      %s686 = int_to_ptr.vmem [resolvable:$true] %s685
      %691 = dma.vmem_to_hbm [thread:$0]  %s686, 512, %s2, [#allocation3], 128, 128, 8
    $region13: #{tpu_custom_call.1} parent=1 // pred_fallthru
      _
    // Predicated region
    $region14: #{tpu_custom_call.1} parent=1 // pred_check
      _
    $region15: #{tpu_custom_call.1} parent=1 // pred_check_branch
      %693 = sbr.rel (0) target = $region17
    $region16: #{tpu_custom_call.1} parent=1 // pred_region
      %694 = dma.done [#allocation3], 512
    $region17: #{tpu_custom_call.1} parent=1 // pred_fallthru
      _
    %695 = vsyncpa [#allocation3], 1

</llo_original>
